<compile_context>
chip_gen: v5e
topology: v5e:2x2
jax: 0.10.0
libtpu: 0.0.40
codegen_flags: <defaults>
</compile_context>

<pallas_src>
import functools

import jax
import jax.numpy as jnp
from jax.experimental import pallas as pl
from jax.experimental.pallas import tpu as pltpu


def _round_up(x, m):
    return ((x + m - 1) // m) * m


def _conv_row_matrix(w_oihw, width):
    """Banded matrix T with  out_row = x_row @ T  == Conv2d(kernel=(1,K), pad=K//2).

    x_row  [ci*W + p]         = x[n, ci, h, p]
    out_row[w*C_out + co]     = conv(x, w)[n, co, h, w]
    T[ci*W + p, w*C_out + co] = w_oihw[co, ci, 0, p - w + pad]   if 0 <= p-w+pad < K
    The conv's zero padding along W is implicit: out-of-range taps get no entry.
    """
    C_out, C_in, _, K = w_oihw.shape
    pad = (K - 1) // 2
    shape4 = (C_in, K, width, C_out)
    ci = jnp.arange(C_in).reshape(C_in, 1, 1, 1)
    k = jnp.arange(K).reshape(1, K, 1, 1)
    w = jnp.arange(width).reshape(1, 1, width, 1)
    co = jnp.arange(C_out).reshape(1, 1, 1, C_out)
    p = w + k - pad                                  # input position tapped by (w, k)
    valid = (p >= 0) & (p < width)
    rows = jnp.broadcast_to(ci * width + jnp.clip(p, 0, width - 1), shape4).reshape(-1)
    cols = jnp.broadcast_to(w * C_out + co, shape4).reshape(-1)
    vals = jnp.transpose(w_oihw[:, :, 0, :], (1, 2, 0))[:, :, None, :]  # (C_in,K,1,C_out)
    vals = jnp.broadcast_to(jnp.where(valid, vals, 0.0), shape4).reshape(-1)
    T = jnp.zeros((C_in * width, width * C_out), dtype=w_oihw.dtype)
    # .add (not .set): clipped out-of-range taps collide with in-range rows but carry
    # value 0, so they are harmless; every real tap lands exactly once.
    return T.at[rows, cols].add(vals)


def _choose_tm(m_rows, width, c_out):
    """Rows per grid step: ~2 MiB f32 output tile, >=4 grid steps when the problem
    allows (pipelining + even grid across v7x's 2 TensorCores), 16-row alignment so
    the bf16 input block satisfies the (16, 128) sublane/lane tiling rule."""
    tm = max(16, ((2 << 20) // (width * c_out * 4)) // 16 * 16)
    if m_rows >= 4 * 16:
        tm = min(tm, max(16, (m_rows // 4) // 16 * 16))
    return min(tm, _round_up(m_rows, 16))


def _init_stage_kernel(x_ref, w_ref, o_ref):
    # x_ref: (TM, C_in*W)       bf16  streamed row block (features on lanes)
    # w_ref: (C_in*W, W*C_out)  bf16  banded conv matrix, resident across the grid
    # o_ref: (TM, W*C_out)      f32   lane-dense output block
    acc = jnp.dot(x_ref[...], w_ref[...], preferred_element_type=jnp.float32)
    o_ref[...] = jnp.maximum(acc, 0.0).astype(o_ref.dtype)     # fused ReLU


@functools.partial(jax.jit, static_argnames=("tm",))
def init_stage_forward(x_nchw, w_oihw, *, tm=None):
    """InitStage forward: Conv2d(C_in->C_out, kernel=(1,K), stride 1,
    padding=(0, K//2), bias=False) followed by ReLU.  NCHW in / NCHW out."""
    N, C_in, H, W = x_nchw.shape
    C_out, C_in_w, KH, K = w_oihw.shape
    assert C_in_w == C_in and KH == 1

    feat_in = C_in * W
    feat_out = W * C_out
    M = N * H
    TM = int(tm) if tm is not None else _choose_tm(M, W, C_out)
    M_pad = _round_up(M, TM)

    # ---- layout glue (no compute): NCHW -> (N*H, C_in*W) rows; bf16 MXU operands.
    x_rows = jnp.transpose(x_nchw, (0, 2, 1, 3)).reshape(M, feat_in)
    x_rows = jnp.pad(x_rows, ((0, M_pad - M), (0, 0)))          # only row padding
    x_in = x_rows.astype(jnp.bfloat16)
    w_mat = _conv_row_matrix(w_oihw, W).astype(jnp.bfloat16)

    in_block = TM * feat_in * 2
    out_block = TM * feat_out * 4
    w_bytes = feat_in * feat_out * 2
    vmem_limit = int(min(64 << 20,
                         max(32 << 20, 2 * (in_block + out_block) + w_bytes + (4 << 20))))

    out_rows = pl.pallas_call(
        _init_stage_kernel,
        out_shape=jax.ShapeDtypeStruct((M_pad, feat_out), jnp.float32),
        grid_spec=pltpu.PrefetchScalarGridSpec(
            num_scalar_prefetch=0,
            grid=(M_pad // TM,),
            in_specs=[
                pl.BlockSpec((TM, feat_in), lambda i: (i, 0)),
                pl.BlockSpec((feat_in, feat_out), lambda i: (0, 0)),   # resident weight
            ],
            out_specs=pl.BlockSpec((TM, feat_out), lambda i: (i, 0)),
        ),
        compiler_params=pltpu.CompilerParams(
            dimension_semantics=("parallel",),
            vmem_limit_bytes=vmem_limit,
        ),
    )(x_in, w_mat)

    out = out_rows[:M].reshape(N, H, W, C_out)
    return jnp.transpose(out, (0, 3, 1, 2)).astype(x_nchw.dtype)


if __name__ == "__main__":
    key = jax.random.PRNGKey(0)
    k_x, k_w = jax.random.split(key)

    # Small shapes consistent with the module defaults (in_channels=2, out_channels=64).
    N, C_in, H, W = 2, 2, 4, 32
    C_out, K = 64, 49

    x = jax.random.normal(k_x, (N, C_in, H, W), dtype=jnp.float32)
    w = 0.1 * jax.random.normal(k_w, (C_out, C_in, 1, K), dtype=jnp.float32)

    out = jax.block_until_ready(init_stage_forward(x, w))
    assert out.shape == (N, C_out, H, W)

    # Reference: the same conv + ReLU on the same bf16-rounded operands (the kernel
    # feeds the MXU bf16 inputs with f32 accumulation), so the check is
    # apples-to-apples; remaining differences are f32 summation order only.
    x_bf = x.astype(jnp.bfloat16).astype(jnp.float32)
    w_bf = w.astype(jnp.bfloat16).astype(jnp.float32)
    ref = jax.lax.conv_general_dilated(
        x_bf, w_bf, window_strides=(1, 1), padding=((0, 0), (K // 2, K // 2)),
        dimension_numbers=("NCHW", "OIHW", "NCHW"),
        preferred_element_type=jnp.float32)
    ref = jnp.maximum(ref, 0.0)

    max_err = float(jnp.max(jnp.abs(out - ref)))
    assert jnp.allclose(out, ref, atol=2e-3, rtol=2e-3), f"mismatch vs reference conv: {max_err}"

    print("KERNEL_OK")
</pallas_src>

<mosaic_0001>
module attributes {stable_mosaic.version = 11 : i64} {
  func.func @_init_stage_kernel(%arg0: i32, %arg1: memref<16x64xbf16, #tpu.memory_space<vmem>>, %arg2: memref<64x2048xbf16, #tpu.memory_space<vmem>>, %arg3: memref<16x2048xf32, #tpu.memory_space<vmem>>) attributes {dimension_semantics = [#tpu.dimension_semantics<parallel>], iteration_bounds = array<i64: 1>, scalar_prefetch = 0 : i64, scratch_operands = 0 : i64, tpu.core_type = #tpu.core_type<tc>, window_params = [{transform_indices = @transform_0, window_bounds = array<i64: 16, 64>}, {pipeline_mode = #tpu.pipeline_mode<synchronous>, transform_indices = @transform_1, window_bounds = array<i64: 64, 2048>}, {transform_indices = @transform_2, window_bounds = array<i64: 16, 2048>}]} {
    %c0 = arith.constant 0 : index
    %c0_0 = arith.constant 0 : index
    %0 = vector.load %arg1[%c0, %c0_0] : memref<16x64xbf16, #tpu.memory_space<vmem>>, vector<16x64xbf16>
    %c0_1 = arith.constant 0 : index
    %c0_2 = arith.constant 0 : index
    %1 = vector.load %arg2[%c0_1, %c0_2] : memref<64x2048xbf16, #tpu.memory_space<vmem>>, vector<64x2048xbf16>
    %cst = arith.constant dense<0.000000e+00> : vector<16x2048xf32>
    %2 = tpu.matmul %0, %1, %cst {dimension_numbers = #tpu.dot_dimension_numbers<[1], [0], [0], [1], [0, 0, 1, 1], [], []>} : vector<16x64xbf16>, vector<64x2048xbf16>, vector<16x2048xf32> -> vector<16x2048xf32>
    %cst_3 = arith.constant 0.000000e+00 : f32
    %3 = vector.broadcast %cst_3 : f32 to vector<16x2048xf32>
    %4 = arith.maximumf %2, %3 : vector<16x2048xf32>
    %c0_4 = arith.constant 0 : index
    %c0_5 = arith.constant 0 : index
    %5 = vector.load %arg3[%c0_4, %c0_5] : memref<16x2048xf32, #tpu.memory_space<vmem>>, vector<16x2048xf32>
    tpu.vector_store %arg3[%c0_4, %c0_5], %4 {strides = array<i32>} : memref<16x2048xf32, #tpu.memory_space<vmem>>, vector<16x2048xf32>,
    return
  }
  func.func @transform_0(%arg0: i32) -> (i32, i32) {
    %c0_i32 = arith.constant 0 : i32
    %c0_i32_0 = arith.constant 0 : i32
    return %arg0, %c0_i32 : i32, i32
  }
  func.func @transform_1(%arg0: i32) -> (i32, i32) {
    %c0_i32 = arith.constant 0 : i32
    %c0_i32_0 = arith.constant 0 : i32
    %c0_i32_1 = arith.constant 0 : i32
    return %c0_i32, %c0_i32_0 : i32, i32
  }
  func.func @transform_2(%arg0: i32) -> (i32, i32) {
    %c0_i32 = arith.constant 0 : i32
    %c0_i32_0 = arith.constant 0 : i32
    return %arg0, %c0_i32 : i32, i32
  }
}

</mosaic_0001>

<llo_original>
// kernel: init_stage_forward.1
$region0: #{init_stage_forward.1}
  #allocation0 [shape = 'u32[]', space=smem, size = 0x4, offset = 0x4, fixed_abs, tag = 'smem constant byte address 0x4 - core index']
  #allocation1 [shape = 'u32[72,128]{1,0:T(1,128)}', space=vmem, size = 0x9000, scoped, tag = 'internal scratch']
  %s0 = inlined_call_operand.vmem [shape: bf16[16,64], index: 0, kind: input, shape index: {}]
  %s1 = inlined_call_operand.vmem [shape: bf16[64,2048], index: 1, kind: input, shape index: {}]
  %s2 = inlined_call_operand.vmem [shape: f32[16,2048], index: 2, kind: output, shape index: {}]
  %s3 = sld [smem:[#allocation0]]
  $region18: #{init_stage_forward.1} parent=0
    _
  %s5 = ssub.s32 1, %s3
  %s6 = scalar_select 0, %s5, %s3
  // Predicated region
  $region2: #{init_stage_forward.1} parent=0 // pred_check
    _
  $region3: #{init_stage_forward.1} parent=0 // pred_check_branch
    %8 = sbr.rel (0) target = $region5
  $region4: #{init_stage_forward.1} parent=0 // pred_region
    _
  $region5: #{init_stage_forward.1} parent=0 // pred_fallthru
    _
  // Predicated region
  $region6: #{init_stage_forward.1} parent=0 // pred_check
    _
  $region7: #{init_stage_forward.1} parent=0 // pred_check_branch
    %10 = sbr.rel (0) target = $region9
  $region8: #{init_stage_forward.1} parent=0 // pred_region
    _
  $region9: #{init_stage_forward.1} parent=0 // pred_fallthru
    _
  %v12 = vld [vmem:[%s0] sm:$0xf]
  %v13 = vld [vmem:[%s0 + $0x4] sm:$0xf]
  %v14 = vld [vmem:[%s1] sm:$0xff]
  %v15 = vld [vmem:[%s1 + $0x8] sm:$0xff]
  %v16 = vld [vmem:[%s1 + $0x10] sm:$0xff]
  %v17 = vld [vmem:[%s1 + $0x18] sm:$0xff]
  %v18 = vld [vmem:[%s1 + $0x20] sm:$0xff]
  %v19 = vld [vmem:[%s1 + $0x28] sm:$0xff]
  %v20 = vld [vmem:[%s1 + $0x30] sm:$0xff]
  %v21 = vld [vmem:[%s1 + $0x38] sm:$0xff]
  %v22 = vld [vmem:[%s1 + $0x40] sm:$0xff]
  %v23 = vld [vmem:[%s1 + $0x48] sm:$0xff]
  %v24 = vld [vmem:[%s1 + $0x50] sm:$0xff]
  %v25 = vld [vmem:[%s1 + $0x58] sm:$0xff]
  %v26 = vld [vmem:[%s1 + $0x60] sm:$0xff]
  %v27 = vld [vmem:[%s1 + $0x68] sm:$0xff]
  %v28 = vld [vmem:[%s1 + $0x70] sm:$0xff]
  %v29 = vld [vmem:[%s1 + $0x78] sm:$0xff]
  %v30 = vld [vmem:[%s1 + $0x80] sm:$0xff]
  %v31 = vld [vmem:[%s1 + $0x88] sm:$0xff]
  %v32 = vld [vmem:[%s1 + $0x90] sm:$0xff]
  %v33 = vld [vmem:[%s1 + $0x98] sm:$0xff]
  %v34 = vld [vmem:[%s1 + $0xa0] sm:$0xff]
  %v35 = vld [vmem:[%s1 + $0xa8] sm:$0xff]
  %v36 = vld [vmem:[%s1 + $0xb0] sm:$0xff]
  %v37 = vld [vmem:[%s1 + $0xb8] sm:$0xff]
  %v38 = vld [vmem:[%s1 + $0xc0] sm:$0xff]
  %v39 = vld [vmem:[%s1 + $0xc8] sm:$0xff]
  %v40 = vld [vmem:[%s1 + $0xd0] sm:$0xff]
  %v41 = vld [vmem:[%s1 + $0xd8] sm:$0xff]
  %v42 = vld [vmem:[%s1 + $0xe0] sm:$0xff]
  %v43 = vld [vmem:[%s1 + $0xe8] sm:$0xff]
  %v44 = vld [vmem:[%s1 + $0xf0] sm:$0xff]
  %v45 = vld [vmem:[%s1 + $0xf8] sm:$0xff]
  %v46 = vld [vmem:[%s1 + $0x100] sm:$0xff]
  %v47 = vld [vmem:[%s1 + $0x108] sm:$0xff]
  %v48 = vld [vmem:[%s1 + $0x110] sm:$0xff]
  %v49 = vld [vmem:[%s1 + $0x118] sm:$0xff]
  %v50 = vld [vmem:[%s1 + $0x120] sm:$0xff]
  %v51 = vld [vmem:[%s1 + $0x128] sm:$0xff]
  %v52 = vld [vmem:[%s1 + $0x130] sm:$0xff]
  %v53 = vld [vmem:[%s1 + $0x138] sm:$0xff]
  %v54 = vld [vmem:[%s1 + $0x140] sm:$0xff]
  %v55 = vld [vmem:[%s1 + $0x148] sm:$0xff]
  %v56 = vld [vmem:[%s1 + $0x150] sm:$0xff]
  %v57 = vld [vmem:[%s1 + $0x158] sm:$0xff]
  %v58 = vld [vmem:[%s1 + $0x160] sm:$0xff]
  %v59 = vld [vmem:[%s1 + $0x168] sm:$0xff]
  %v60 = vld [vmem:[%s1 + $0x170] sm:$0xff]
  %v61 = vld [vmem:[%s1 + $0x178] sm:$0xff]
  %v62 = vld [vmem:[%s1 + $0x180] sm:$0xff]
  %v63 = vld [vmem:[%s1 + $0x188] sm:$0xff]
  %v64 = vld [vmem:[%s1 + $0x190] sm:$0xff]
  %v65 = vld [vmem:[%s1 + $0x198] sm:$0xff]
  %v66 = vld [vmem:[%s1 + $0x1a0] sm:$0xff]
  %v67 = vld [vmem:[%s1 + $0x1a8] sm:$0xff]
  %v68 = vld [vmem:[%s1 + $0x1b0] sm:$0xff]
  %v69 = vld [vmem:[%s1 + $0x1b8] sm:$0xff]
  %v70 = vld [vmem:[%s1 + $0x1c0] sm:$0xff]
  %v71 = vld [vmem:[%s1 + $0x1c8] sm:$0xff]
  %v72 = vld [vmem:[%s1 + $0x1d0] sm:$0xff]
  %v73 = vld [vmem:[%s1 + $0x1d8] sm:$0xff]
  %v74 = vld [vmem:[%s1 + $0x1e0] sm:$0xff]
  %v75 = vld [vmem:[%s1 + $0x1e8] sm:$0xff]
  %v76 = vld [vmem:[%s1 + $0x1f0] sm:$0xff]
  %v77 = vld [vmem:[%s1 + $0x1f8] sm:$0xff]
  %v80 = vunpack.c.l.b16 %v12
  %v81 = vunpack.c.l.b16 %v13
  %v82 = vpack.c.b16 %v81, %v80
  %v147 = vunpack.c.l.b16 %v14
  %v148 = vunpack.c.h.b16 %v14
  %v149 = vunpack.c.l.b16 %v15
  %v150 = vunpack.c.h.b16 %v15
  %v151 = vunpack.c.l.b16 %v16
  %v152 = vunpack.c.h.b16 %v16
  %v153 = vunpack.c.l.b16 %v17
  %v154 = vunpack.c.h.b16 %v17
  %v155 = vunpack.c.l.b16 %v18
  %v156 = vunpack.c.h.b16 %v18
  %v157 = vunpack.c.l.b16 %v19
  %v158 = vunpack.c.h.b16 %v19
  %v159 = vunpack.c.l.b16 %v20
  %v160 = vunpack.c.h.b16 %v20
  %v161 = vunpack.c.l.b16 %v21
  %v162 = vunpack.c.h.b16 %v21
  %v163 = vunpack.c.l.b16 %v22
  %v164 = vunpack.c.h.b16 %v22
  %v165 = vunpack.c.l.b16 %v23
  %v166 = vunpack.c.h.b16 %v23
  %v167 = vunpack.c.l.b16 %v24
  %v168 = vunpack.c.h.b16 %v24
  %v169 = vunpack.c.l.b16 %v25
  %v170 = vunpack.c.h.b16 %v25
  %v171 = vunpack.c.l.b16 %v26
  %v172 = vunpack.c.h.b16 %v26
  %v173 = vunpack.c.l.b16 %v27
  %v174 = vunpack.c.h.b16 %v27
  %v175 = vunpack.c.l.b16 %v28
  %v176 = vunpack.c.h.b16 %v28
  %v177 = vunpack.c.l.b16 %v29
  %v178 = vunpack.c.h.b16 %v29
  %v179 = vunpack.c.l.b16 %v30
  %v180 = vunpack.c.h.b16 %v30
  %v181 = vunpack.c.l.b16 %v31
  %v182 = vunpack.c.h.b16 %v31
  %v183 = vunpack.c.l.b16 %v32
  %v184 = vunpack.c.h.b16 %v32
  %v185 = vunpack.c.l.b16 %v33
  %v186 = vunpack.c.h.b16 %v33
  %v187 = vunpack.c.l.b16 %v34
  %v188 = vunpack.c.h.b16 %v34
  %v189 = vunpack.c.l.b16 %v35
  %v190 = vunpack.c.h.b16 %v35
  %v191 = vunpack.c.l.b16 %v36
  %v192 = vunpack.c.h.b16 %v36
  %v193 = vunpack.c.l.b16 %v37
  %v194 = vunpack.c.h.b16 %v37
  %v195 = vunpack.c.l.b16 %v38
  %v196 = vunpack.c.h.b16 %v38
  %v197 = vunpack.c.l.b16 %v39
  %v198 = vunpack.c.h.b16 %v39
  %v199 = vunpack.c.l.b16 %v40
  %v200 = vunpack.c.h.b16 %v40
  %v201 = vunpack.c.l.b16 %v41
  %v202 = vunpack.c.h.b16 %v41
  %v203 = vunpack.c.l.b16 %v42
  %v204 = vunpack.c.h.b16 %v42
  %v205 = vunpack.c.l.b16 %v43
  %v206 = vunpack.c.h.b16 %v43
  %v207 = vunpack.c.l.b16 %v44
  %v208 = vunpack.c.h.b16 %v44
  %v209 = vunpack.c.l.b16 %v45
  %v210 = vunpack.c.h.b16 %v45
  %v211 = vunpack.c.l.b16 %v46
  %v212 = vunpack.c.h.b16 %v46
  %v213 = vunpack.c.l.b16 %v47
  %v214 = vunpack.c.h.b16 %v47
  %v215 = vunpack.c.l.b16 %v48
  %v216 = vunpack.c.h.b16 %v48
  %v217 = vunpack.c.l.b16 %v49
  %v218 = vunpack.c.h.b16 %v49
  %v219 = vunpack.c.l.b16 %v50
  %v220 = vunpack.c.h.b16 %v50
  %v221 = vunpack.c.l.b16 %v51
  %v222 = vunpack.c.h.b16 %v51
  %v223 = vunpack.c.l.b16 %v52
  %v224 = vunpack.c.h.b16 %v52
  %v225 = vunpack.c.l.b16 %v53
  %v226 = vunpack.c.h.b16 %v53
  %v227 = vunpack.c.l.b16 %v54
  %v228 = vunpack.c.h.b16 %v54
  %v229 = vunpack.c.l.b16 %v55
  %v230 = vunpack.c.h.b16 %v55
  %v231 = vunpack.c.l.b16 %v56
  %v232 = vunpack.c.h.b16 %v56
  %v233 = vunpack.c.l.b16 %v57
  %v234 = vunpack.c.h.b16 %v57
  %v235 = vunpack.c.l.b16 %v58
  %v236 = vunpack.c.h.b16 %v58
  %v237 = vunpack.c.l.b16 %v59
  %v238 = vunpack.c.h.b16 %v59
  %v239 = vunpack.c.l.b16 %v60
  %v240 = vunpack.c.h.b16 %v60
  %v241 = vunpack.c.l.b16 %v61
  %v242 = vunpack.c.h.b16 %v61
  %v243 = vunpack.c.l.b16 %v62
  %v244 = vunpack.c.h.b16 %v62
  %v245 = vunpack.c.l.b16 %v63
  %v246 = vunpack.c.h.b16 %v63
  %v247 = vunpack.c.l.b16 %v64
  %v248 = vunpack.c.h.b16 %v64
  %v249 = vunpack.c.l.b16 %v65
  %v250 = vunpack.c.h.b16 %v65
  %v251 = vunpack.c.l.b16 %v66
  %v252 = vunpack.c.h.b16 %v66
  %v253 = vunpack.c.l.b16 %v67
  %v254 = vunpack.c.h.b16 %v67
  %v255 = vunpack.c.l.b16 %v68
  %v256 = vunpack.c.h.b16 %v68
  %v257 = vunpack.c.l.b16 %v69
  %v258 = vunpack.c.h.b16 %v69
  %v259 = vunpack.c.l.b16 %v70
  %v260 = vunpack.c.h.b16 %v70
  %v261 = vunpack.c.l.b16 %v71
  %v262 = vunpack.c.h.b16 %v71
  %v263 = vunpack.c.l.b16 %v72
  %v264 = vunpack.c.h.b16 %v72
  %v265 = vunpack.c.l.b16 %v73
  %v266 = vunpack.c.h.b16 %v73
  %v267 = vunpack.c.l.b16 %v74
  %v268 = vunpack.c.h.b16 %v74
  %v269 = vunpack.c.l.b16 %v75
  %v270 = vunpack.c.h.b16 %v75
  %v271 = vunpack.c.l.b16 %v76
  %v272 = vunpack.c.h.b16 %v76
  %v273 = vunpack.c.l.b16 %v77
  %v274 = vunpack.c.h.b16 %v77
  %v275 = vpack.c.b16 %v163, %v147
  %v276 = vpack.c.b16 %v164, %v148
  %v277 = vpack.c.b16 %v165, %v149
  %v278 = vpack.c.b16 %v166, %v150
  %v279 = vpack.c.b16 %v167, %v151
  %v280 = vpack.c.b16 %v168, %v152
  %v281 = vpack.c.b16 %v169, %v153
  %v282 = vpack.c.b16 %v170, %v154
  %v283 = vpack.c.b16 %v171, %v155
  %v284 = vpack.c.b16 %v172, %v156
  %v285 = vpack.c.b16 %v173, %v157
  %v286 = vpack.c.b16 %v174, %v158
  %v287 = vpack.c.b16 %v175, %v159
  %v288 = vpack.c.b16 %v176, %v160
  %v289 = vpack.c.b16 %v177, %v161
  %v290 = vpack.c.b16 %v178, %v162
  %v291 = vpack.c.b16 %v195, %v179
  %v292 = vpack.c.b16 %v196, %v180
  %v293 = vpack.c.b16 %v197, %v181
  %v294 = vpack.c.b16 %v198, %v182
  %v295 = vpack.c.b16 %v199, %v183
  %v296 = vpack.c.b16 %v200, %v184
  %v297 = vpack.c.b16 %v201, %v185
  %v298 = vpack.c.b16 %v202, %v186
  %v299 = vpack.c.b16 %v203, %v187
  %v300 = vpack.c.b16 %v204, %v188
  %v301 = vpack.c.b16 %v205, %v189
  %v302 = vpack.c.b16 %v206, %v190
  %v303 = vpack.c.b16 %v207, %v191
  %v304 = vpack.c.b16 %v208, %v192
  %v305 = vpack.c.b16 %v209, %v193
  %v306 = vpack.c.b16 %v210, %v194
  %v307 = vpack.c.b16 %v227, %v211
  %v308 = vpack.c.b16 %v228, %v212
  %v309 = vpack.c.b16 %v229, %v213
  %v310 = vpack.c.b16 %v230, %v214
  %v311 = vpack.c.b16 %v231, %v215
  %v312 = vpack.c.b16 %v232, %v216
  %v313 = vpack.c.b16 %v233, %v217
  %v314 = vpack.c.b16 %v234, %v218
  %v315 = vpack.c.b16 %v235, %v219
  %v316 = vpack.c.b16 %v236, %v220
  %v317 = vpack.c.b16 %v237, %v221
  %v318 = vpack.c.b16 %v238, %v222
  %v319 = vpack.c.b16 %v239, %v223
  %v320 = vpack.c.b16 %v240, %v224
  %v321 = vpack.c.b16 %v241, %v225
  %v322 = vpack.c.b16 %v242, %v226
  %v323 = vpack.c.b16 %v259, %v243
  %v324 = vpack.c.b16 %v260, %v244
  %v325 = vpack.c.b16 %v261, %v245
  %v326 = vpack.c.b16 %v262, %v246
  %v327 = vpack.c.b16 %v263, %v247
  %v328 = vpack.c.b16 %v264, %v248
  %v329 = vpack.c.b16 %v265, %v249
  %v330 = vpack.c.b16 %v266, %v250
  %v331 = vpack.c.b16 %v267, %v251
  %v332 = vpack.c.b16 %v268, %v252
  %v333 = vpack.c.b16 %v269, %v253
  %v334 = vpack.c.b16 %v270, %v254
  %v335 = vpack.c.b16 %v271, %v255
  %v336 = vpack.c.b16 %v272, %v256
  %v337 = vpack.c.b16 %v273, %v257
  %v338 = vpack.c.b16 %v274, %v258
  %vm403 = vcmask 523264
  %v405 = vsel %vm403, %v82, 0
  %407 = vmatpush.bf16.msra.mxu0 0
  %408 = vmatpush.bf16.msra.mxu0 0
  %409 = vmatpush.bf16.msra.mxu0 0
  %410 = vmatpush.bf16.msra.mxu0 0
  %411 = vmatpush.bf16.msra.mxu0 %v323
  %412 = vmatpush.bf16.msra.mxu0 %v307
  %413 = vmatpush.bf16.msra.mxu0 %v291
  %414 = vmatpush.bf16.msra.mxu0 %v275
  %415 = vmatmul.bf16.gmra.mxu0 %v405
  %v416 = vpop.f32.mrf.mxu0
  %v417 = vadd.f32 0.0, %v416
  %v418 = vpop.f32.mrf.mxu0
  %v419 = vadd.f32 0.0, %v418
  %420 = vdwg.mxu0
  %421 = vmatpush.bf16.msra.mxu0 0
  %422 = vmatpush.bf16.msra.mxu0 0
  %423 = vmatpush.bf16.msra.mxu0 0
  %424 = vmatpush.bf16.msra.mxu0 0
  %425 = vmatpush.bf16.msra.mxu0 %v324
  %426 = vmatpush.bf16.msra.mxu0 %v308
  %427 = vmatpush.bf16.msra.mxu0 %v292
  %428 = vmatpush.bf16.msra.mxu0 %v276
  %429 = vmatmul.bf16.gmra.mxu0 %v405
  %v430 = vpop.f32.mrf.mxu0
  %v431 = vadd.f32 0.0, %v430
  %v432 = vpop.f32.mrf.mxu0
  %v433 = vadd.f32 0.0, %v432
  %434 = vdwg.mxu0
  %435 = vmatpush.bf16.msra.mxu0 0
  %436 = vmatpush.bf16.msra.mxu0 0
  %437 = vmatpush.bf16.msra.mxu0 0
  %438 = vmatpush.bf16.msra.mxu0 0
  %439 = vmatpush.bf16.msra.mxu0 %v325
  %440 = vmatpush.bf16.msra.mxu0 %v309
  %441 = vmatpush.bf16.msra.mxu0 %v293
  %442 = vmatpush.bf16.msra.mxu0 %v277
  %443 = vmatmul.bf16.gmra.mxu0 %v405
  %v444 = vpop.f32.mrf.mxu0
  %v445 = vadd.f32 0.0, %v444
  %v446 = vpop.f32.mrf.mxu0
  %v447 = vadd.f32 0.0, %v446
  %448 = vdwg.mxu0
  %449 = vmatpush.bf16.msra.mxu0 0
  %450 = vmatpush.bf16.msra.mxu0 0
  %451 = vmatpush.bf16.msra.mxu0 0
  %452 = vmatpush.bf16.msra.mxu0 0
  %453 = vmatpush.bf16.msra.mxu0 %v326
  %454 = vmatpush.bf16.msra.mxu0 %v310
  %455 = vmatpush.bf16.msra.mxu0 %v294
  %456 = vmatpush.bf16.msra.mxu0 %v278
  %457 = vmatmul.bf16.gmra.mxu0 %v405
  %v458 = vpop.f32.mrf.mxu0
  %v459 = vadd.f32 0.0, %v458
  %v460 = vpop.f32.mrf.mxu0
  %v461 = vadd.f32 0.0, %v460
  %462 = vdwg.mxu0
  %463 = vmatpush.bf16.msra.mxu0 0
  %464 = vmatpush.bf16.msra.mxu0 0
  %465 = vmatpush.bf16.msra.mxu0 0
  %466 = vmatpush.bf16.msra.mxu0 0
  %467 = vmatpush.bf16.msra.mxu0 %v327
  %468 = vmatpush.bf16.msra.mxu0 %v311
  %469 = vmatpush.bf16.msra.mxu0 %v295
  %470 = vmatpush.bf16.msra.mxu0 %v279
  %471 = vmatmul.bf16.gmra.mxu0 %v405
  %v472 = vpop.f32.mrf.mxu0
  %v473 = vadd.f32 0.0, %v472
  %v474 = vpop.f32.mrf.mxu0
  %v475 = vadd.f32 0.0, %v474
  %476 = vdwg.mxu0
  %477 = vmatpush.bf16.msra.mxu0 0
  %478 = vmatpush.bf16.msra.mxu0 0
  %479 = vmatpush.bf16.msra.mxu0 0
  %480 = vmatpush.bf16.msra.mxu0 0
  %481 = vmatpush.bf16.msra.mxu0 %v328
  %482 = vmatpush.bf16.msra.mxu0 %v312
  %483 = vmatpush.bf16.msra.mxu0 %v296
  %484 = vmatpush.bf16.msra.mxu0 %v280
  %485 = vmatmul.bf16.gmra.mxu0 %v405
  %v486 = vpop.f32.mrf.mxu0
  %v487 = vadd.f32 0.0, %v486
  %v488 = vpop.f32.mrf.mxu0
  %v489 = vadd.f32 0.0, %v488
  %490 = vdwg.mxu0
  %491 = vmatpush.bf16.msra.mxu0 0
  %492 = vmatpush.bf16.msra.mxu0 0
  %493 = vmatpush.bf16.msra.mxu0 0
  %494 = vmatpush.bf16.msra.mxu0 0
  %495 = vmatpush.bf16.msra.mxu0 %v329
  %496 = vmatpush.bf16.msra.mxu0 %v313
  %497 = vmatpush.bf16.msra.mxu0 %v297
  %498 = vmatpush.bf16.msra.mxu0 %v281
  %499 = vmatmul.bf16.gmra.mxu0 %v405
  %v500 = vpop.f32.mrf.mxu0
  %v501 = vadd.f32 0.0, %v500
  %v502 = vpop.f32.mrf.mxu0
  %v503 = vadd.f32 0.0, %v502
  %504 = vdwg.mxu0
  %505 = vmatpush.bf16.msra.mxu0 0
  %506 = vmatpush.bf16.msra.mxu0 0
  %507 = vmatpush.bf16.msra.mxu0 0
  %508 = vmatpush.bf16.msra.mxu0 0
  %509 = vmatpush.bf16.msra.mxu0 %v330
  %510 = vmatpush.bf16.msra.mxu0 %v314
  %511 = vmatpush.bf16.msra.mxu0 %v298
  %512 = vmatpush.bf16.msra.mxu0 %v282
  %513 = vmatmul.bf16.gmra.mxu0 %v405
  %v514 = vpop.f32.mrf.mxu0
  %v515 = vadd.f32 0.0, %v514
  %v516 = vpop.f32.mrf.mxu0
  %v517 = vadd.f32 0.0, %v516
  %518 = vdwg.mxu0
  %519 = vmatpush.bf16.msra.mxu0 0
  %520 = vmatpush.bf16.msra.mxu0 0
  %521 = vmatpush.bf16.msra.mxu0 0
  %522 = vmatpush.bf16.msra.mxu0 0
  %523 = vmatpush.bf16.msra.mxu0 %v331
  %524 = vmatpush.bf16.msra.mxu0 %v315
  %525 = vmatpush.bf16.msra.mxu0 %v299
  %526 = vmatpush.bf16.msra.mxu0 %v283
  %527 = vmatmul.bf16.gmra.mxu0 %v405
  %v528 = vpop.f32.mrf.mxu0
  %v529 = vadd.f32 0.0, %v528
  %v530 = vpop.f32.mrf.mxu0
  %v531 = vadd.f32 0.0, %v530
  %532 = vdwg.mxu0
  %533 = vmatpush.bf16.msra.mxu0 0
  %534 = vmatpush.bf16.msra.mxu0 0
  %535 = vmatpush.bf16.msra.mxu0 0
  %536 = vmatpush.bf16.msra.mxu0 0
  %537 = vmatpush.bf16.msra.mxu0 %v332
  %538 = vmatpush.bf16.msra.mxu0 %v316
  %539 = vmatpush.bf16.msra.mxu0 %v300
  %540 = vmatpush.bf16.msra.mxu0 %v284
  %541 = vmatmul.bf16.gmra.mxu0 %v405
  %v542 = vpop.f32.mrf.mxu0
  %v543 = vadd.f32 0.0, %v542
  %v544 = vpop.f32.mrf.mxu0
  %v545 = vadd.f32 0.0, %v544
  %546 = vdwg.mxu0
  %547 = vmatpush.bf16.msra.mxu0 0
  %548 = vmatpush.bf16.msra.mxu0 0
  %549 = vmatpush.bf16.msra.mxu0 0
  %550 = vmatpush.bf16.msra.mxu0 0
  %551 = vmatpush.bf16.msra.mxu0 %v333
  %552 = vmatpush.bf16.msra.mxu0 %v317
  %553 = vmatpush.bf16.msra.mxu0 %v301
  %554 = vmatpush.bf16.msra.mxu0 %v285
  %555 = vmatmul.bf16.gmra.mxu0 %v405
  %v556 = vpop.f32.mrf.mxu0
  %v557 = vadd.f32 0.0, %v556
  %v558 = vpop.f32.mrf.mxu0
  %v559 = vadd.f32 0.0, %v558
  %560 = vdwg.mxu0
  %561 = vmatpush.bf16.msra.mxu0 0
  %562 = vmatpush.bf16.msra.mxu0 0
  %563 = vmatpush.bf16.msra.mxu0 0
  %564 = vmatpush.bf16.msra.mxu0 0
  %565 = vmatpush.bf16.msra.mxu0 %v334
  %566 = vmatpush.bf16.msra.mxu0 %v318
  %567 = vmatpush.bf16.msra.mxu0 %v302
  %568 = vmatpush.bf16.msra.mxu0 %v286
  %569 = vmatmul.bf16.gmra.mxu0 %v405
  %v570 = vpop.f32.mrf.mxu0
  %v571 = vadd.f32 0.0, %v570
  %v572 = vpop.f32.mrf.mxu0
  %v573 = vadd.f32 0.0, %v572
  %574 = vdwg.mxu0
  %575 = vmatpush.bf16.msra.mxu0 0
  %576 = vmatpush.bf16.msra.mxu0 0
  %577 = vmatpush.bf16.msra.mxu0 0
  %578 = vmatpush.bf16.msra.mxu0 0
  %579 = vmatpush.bf16.msra.mxu0 %v335
  %580 = vmatpush.bf16.msra.mxu0 %v319
  %581 = vmatpush.bf16.msra.mxu0 %v303
  %582 = vmatpush.bf16.msra.mxu0 %v287
  %583 = vmatmul.bf16.gmra.mxu0 %v405
  %v584 = vpop.f32.mrf.mxu0
  %v585 = vadd.f32 0.0, %v584
  %v586 = vpop.f32.mrf.mxu0
  %v587 = vadd.f32 0.0, %v586
  %588 = vdwg.mxu0
  %589 = vmatpush.bf16.msra.mxu0 0
  %590 = vmatpush.bf16.msra.mxu0 0
  %591 = vmatpush.bf16.msra.mxu0 0
  %592 = vmatpush.bf16.msra.mxu0 0
  %593 = vmatpush.bf16.msra.mxu0 %v336
  %594 = vmatpush.bf16.msra.mxu0 %v320
  %595 = vmatpush.bf16.msra.mxu0 %v304
  %596 = vmatpush.bf16.msra.mxu0 %v288
  %597 = vmatmul.bf16.gmra.mxu0 %v405
  %v598 = vpop.f32.mrf.mxu0
  %v599 = vadd.f32 0.0, %v598
  %v600 = vpop.f32.mrf.mxu0
  %v601 = vadd.f32 0.0, %v600
  %602 = vdwg.mxu0
  %603 = vmatpush.bf16.msra.mxu0 0
  %604 = vmatpush.bf16.msra.mxu0 0
  %605 = vmatpush.bf16.msra.mxu0 0
  %606 = vmatpush.bf16.msra.mxu0 0
  %607 = vmatpush.bf16.msra.mxu0 %v337
  %608 = vmatpush.bf16.msra.mxu0 %v321
  %609 = vmatpush.bf16.msra.mxu0 %v305
  %610 = vmatpush.bf16.msra.mxu0 %v289
  %611 = vmatmul.bf16.gmra.mxu0 %v405
  %v612 = vpop.f32.mrf.mxu0
  %v613 = vadd.f32 0.0, %v612
  %v614 = vpop.f32.mrf.mxu0
  %v615 = vadd.f32 0.0, %v614
  %616 = vdwg.mxu0
  %617 = vmatpush.bf16.msra.mxu0 0
  %618 = vmatpush.bf16.msra.mxu0 0
  %619 = vmatpush.bf16.msra.mxu0 0
  %620 = vmatpush.bf16.msra.mxu0 0
  %621 = vmatpush.bf16.msra.mxu0 %v338
  %622 = vmatpush.bf16.msra.mxu0 %v322
  %623 = vmatpush.bf16.msra.mxu0 %v306
  %624 = vmatpush.bf16.msra.mxu0 %v290
  %625 = vmatmul.bf16.gmra.mxu0 %v405
  %v626 = vpop.f32.mrf.mxu0
  %v627 = vadd.f32 0.0, %v626
  %v628 = vpop.f32.mrf.mxu0
  %v629 = vadd.f32 0.0, %v628
  %630 = vdwg.mxu0
  %v631 = vmax.f32 %v417, 0.0
  %v632 = vmax.f32 %v431, 0.0
  %v633 = vmax.f32 %v445, 0.0
  %v634 = vmax.f32 %v459, 0.0
  %v635 = vmax.f32 %v473, 0.0
  %v636 = vmax.f32 %v487, 0.0
  %v637 = vmax.f32 %v501, 0.0
  %v638 = vmax.f32 %v515, 0.0
  %v639 = vmax.f32 %v529, 0.0
  %v640 = vmax.f32 %v543, 0.0
  %v641 = vmax.f32 %v557, 0.0
  %v642 = vmax.f32 %v571, 0.0
  %v643 = vmax.f32 %v585, 0.0
  %v644 = vmax.f32 %v599, 0.0
  %v645 = vmax.f32 %v613, 0.0
  %v646 = vmax.f32 %v627, 0.0
  %v647 = vmax.f32 %v419, 0.0
  %v648 = vmax.f32 %v433, 0.0
  %v649 = vmax.f32 %v447, 0.0
  %v650 = vmax.f32 %v461, 0.0
  %v651 = vmax.f32 %v475, 0.0
  %v652 = vmax.f32 %v489, 0.0
  %v653 = vmax.f32 %v503, 0.0
  %v654 = vmax.f32 %v517, 0.0
  %v655 = vmax.f32 %v531, 0.0
  %v656 = vmax.f32 %v545, 0.0
  %v657 = vmax.f32 %v559, 0.0
  %v658 = vmax.f32 %v573, 0.0
  %v659 = vmax.f32 %v587, 0.0
  %v660 = vmax.f32 %v601, 0.0
  %v661 = vmax.f32 %v615, 0.0
  %v662 = vmax.f32 %v629, 0.0
  %663 = vst [vmem:[%s2] sm:$0xff] %v631
  %664 = vst [vmem:[%s2 + $0x8] sm:$0xff] %v632
  %665 = vst [vmem:[%s2 + $0x10] sm:$0xff] %v633
  %666 = vst [vmem:[%s2 + $0x18] sm:$0xff] %v634
  %667 = vst [vmem:[%s2 + $0x20] sm:$0xff] %v635
  %668 = vst [vmem:[%s2 + $0x28] sm:$0xff] %v636
  %669 = vst [vmem:[%s2 + $0x30] sm:$0xff] %v637
  %670 = vst [vmem:[%s2 + $0x38] sm:$0xff] %v638
  %671 = vst [vmem:[%s2 + $0x40] sm:$0xff] %v639
  %672 = vst [vmem:[%s2 + $0x48] sm:$0xff] %v640
  %673 = vst [vmem:[%s2 + $0x50] sm:$0xff] %v641
  %674 = vst [vmem:[%s2 + $0x58] sm:$0xff] %v642
  %675 = vst [vmem:[%s2 + $0x60] sm:$0xff] %v643
  %676 = vst [vmem:[%s2 + $0x68] sm:$0xff] %v644
  %677 = vst [vmem:[%s2 + $0x70] sm:$0xff] %v645
  %678 = vst [vmem:[%s2 + $0x78] sm:$0xff] %v646
  %679 = vst [vmem:[%s2 + $0x80] sm:$0xff] %v647
  %680 = vst [vmem:[%s2 + $0x88] sm:$0xff] %v648
  %681 = vst [vmem:[%s2 + $0x90] sm:$0xff] %v649
  %682 = vst [vmem:[%s2 + $0x98] sm:$0xff] %v650
  %683 = vst [vmem:[%s2 + $0xa0] sm:$0xff] %v651
  %684 = vst [vmem:[%s2 + $0xa8] sm:$0xff] %v652
  %685 = vst [vmem:[%s2 + $0xb0] sm:$0xff] %v653
  %686 = vst [vmem:[%s2 + $0xb8] sm:$0xff] %v654
  %687 = vst [vmem:[%s2 + $0xc0] sm:$0xff] %v655
  %688 = vst [vmem:[%s2 + $0xc8] sm:$0xff] %v656
  %689 = vst [vmem:[%s2 + $0xd0] sm:$0xff] %v657
  %690 = vst [vmem:[%s2 + $0xd8] sm:$0xff] %v658
  %691 = vst [vmem:[%s2 + $0xe0] sm:$0xff] %v659
  %692 = vst [vmem:[%s2 + $0xe8] sm:$0xff] %v660
  %693 = vst [vmem:[%s2 + $0xf0] sm:$0xff] %v661
  %694 = vst [vmem:[%s2 + $0xf8] sm:$0xff] %v662
  // Predicated region
  $region10: #{init_stage_forward.1} parent=0 // pred_check
    _
  $region11: #{init_stage_forward.1} parent=0 // pred_check_branch
    %696 = sbr.rel (0) target = $region13
  $region12: #{init_stage_forward.1} parent=0 // pred_region
    _
  $region13: #{init_stage_forward.1} parent=0 // pred_fallthru
    _
  // Predicated region
  $region14: #{init_stage_forward.1} parent=0 // pred_check
    _
  $region15: #{init_stage_forward.1} parent=0 // pred_check_branch
    %698 = sbr.rel (0) target = $region17
  $region16: #{init_stage_forward.1} parent=0 // pred_region
    _
  $region17: #{init_stage_forward.1} parent=0 // pred_fallthru
    _

</llo_original>
